<compile_context>
chip_gen: v6e
topology: v6e:2x2x1
jax: 0.10.0
libtpu: 0.0.40
codegen_flags: <defaults>
</compile_context>

<pallas_src>
import jax
import jax.numpy as jnp
from jax.experimental import pallas as pl
from jax.experimental.pallas import tpu as pltpu


# ---------------------------------------------------------------------------
# Kernels
# ---------------------------------------------------------------------------

def _stats_kernel(x_ref, sum_ref, sumsq_ref):
    """Accumulate per-channel sum and sum-of-squares over all (N, L) tiles.

    x_ref     : (TN, C, TL) tile of the (N, C, L) input (C on sublanes, L on lanes).
    sum_ref   : (1, C, 1) f32 accumulator (same output block for every grid step).
    sumsq_ref : (1, C, 1) f32 accumulator.
    """
    i = pl.program_id(0)
    j = pl.program_id(1)

    @pl.when((i == 0) & (j == 0))
    def _():
        sum_ref[...] = jnp.zeros_like(sum_ref)
        sumsq_ref[...] = jnp.zeros_like(sumsq_ref)

    x = x_ref[...].astype(jnp.float32)                       # per-tile cast only
    xs = jnp.sum(x, axis=0, keepdims=True)                   # (1, C, TL)  VPU adds
    xsq = jnp.sum(x * x, axis=0, keepdims=True)              # (1, C, TL)
    sum_ref[...] += jnp.sum(xs, axis=-1, keepdims=True)      # lane reduce -> (1, C, 1)
    sumsq_ref[...] += jnp.sum(xsq, axis=-1, keepdims=True)   # lane reduce -> (1, C, 1)


def _normalize_kernel(x_ref, scale_ref, shift_ref, y_ref):
    """y = x * scale + shift, per-channel scale/shift broadcast over (N, L)."""
    y = x_ref[...] * scale_ref[...] + shift_ref[...]         # promotes to f32 if bf16
    y_ref[...] = y.astype(y_ref.dtype)


# ---------------------------------------------------------------------------
# Tile selection helpers
# ---------------------------------------------------------------------------

_X_BLOCK_BUDGET_BYTES = 2 * 1024 * 1024   # one x tile; 2x-buffered x + y stays well
                                          # under the 16 MiB v5e scoped default and
                                          # v7x's 64 MiB physical VMEM.


def _pick_lane_tile(dim, quantum, limit):
    """Largest multiple of `quantum` dividing `dim`, <= limit (capped at 2048).

    Falls back to the full dimension when `dim` is not a multiple of `quantum`
    (a full-extent block is exempt from the (8, 128) divisibility rule)."""
    if dim % quantum != 0:
        return dim
    best = quantum
    cand = quantum
    top = min(dim, max(limit, quantum), 2048)
    while cand <= top:
        if dim % cand == 0:
            best = cand
        cand += quantum
    return best


def _pick_leading_tile(dim, limit):
    """Largest divisor of `dim` that is <= limit (limit capped at 64)."""
    limit = max(1, min(dim, limit, 64))
    best = 1
    for cand in range(1, limit + 1):
        if dim % cand == 0:
            best = cand
    return best


# ---------------------------------------------------------------------------
# Wrapper
# ---------------------------------------------------------------------------

def batch_renorm(x, weight, bias, running_mean, running_var,
                 *, momentum=0.01, eps=1e-06, training=True):
    """Forward pass of batchRenorm.

    Args:
      x: (N, C, L) input (same axis convention as the PyTorch module).
      weight, bias, running_mean, running_var: (C,) parameters / buffers.

    Returns:
      (y, new_running_mean, new_running_var), y with shape (N, C, L).
    """
    n, c, l = x.shape
    m = n * l
    itemsize = x.dtype.itemsize

    # --- tile selection: (TN, C, TL) blocks, C on sublanes, L on lanes ------
    tl_limit = max(1, _X_BLOCK_BUDGET_BYTES // max(c * itemsize, 1))
    tl = _pick_lane_tile(l, 128, tl_limit)
    tn_limit = max(1, _X_BLOCK_BUDGET_BYTES // max(c * tl * itemsize, 1))
    tn = _pick_leading_tile(n, tn_limit)
    grid = (n // tn, l // tl)

    x_spec = pl.BlockSpec((tn, c, tl), lambda i, j: (i, 0, j))
    vec_spec = pl.BlockSpec((1, c, 1), lambda i, j: (0, 0, 0))

    rm = running_mean.astype(jnp.float32)
    rv = running_var.astype(jnp.float32)
    momentum = float(momentum)
    eps = float(eps)

    if training:
        x_sum, x_sumsq = pl.pallas_call(
            _stats_kernel,
            grid=grid,
            in_specs=[x_spec],
            out_specs=(vec_spec, vec_spec),
            out_shape=(
                jax.ShapeDtypeStruct((1, c, 1), jnp.float32),
                jax.ShapeDtypeStruct((1, c, 1), jnp.float32),
            ),
            compiler_params=pltpu.CompilerParams(
                dimension_semantics=("arbitrary", "arbitrary")),
        )(x)

        mean = x_sum.reshape(c) / m
        # torch.var(..., 0) is unbiased (divide by M-1).  The PyTorch module
        # would produce NaN for M == 1; we guard the denominator instead.
        denom = (m - 1) if m > 1 else 1
        var = (x_sumsq.reshape(c) - m * mean * mean) / denom
        new_rm = (1.0 - momentum) * rm + momentum * mean
        new_rv = (1.0 - momentum) * rv + momentum * var
    else:
        new_rm = rm
        new_rv = rv

    # Per-channel math hoisted out of the per-element path (one (C,)-sized op).
    # NOTE: matches the PyTorch module exactly — eps is added AFTER the sqrt.
    std = jnp.sqrt(new_rv) + eps
    scale = weight.astype(jnp.float32) / std
    shift = bias.astype(jnp.float32) - new_rm * scale

    y = pl.pallas_call(
        _normalize_kernel,
        grid=grid,
        in_specs=[x_spec, vec_spec, vec_spec],
        out_specs=x_spec,
        out_shape=jax.ShapeDtypeStruct((n, c, l), x.dtype),
        compiler_params=pltpu.CompilerParams(
            dimension_semantics=("parallel", "parallel")),
    )(x, scale.reshape(1, c, 1), shift.reshape(1, c, 1))

    return y, new_rm, new_rv


# ---------------------------------------------------------------------------
# Pure-JAX reference mirroring the PyTorch forward exactly
# ---------------------------------------------------------------------------

def _reference(x, weight, bias, running_mean, running_var,
               *, momentum=0.01, eps=1e-06, training=True):
    n, c, l = x.shape
    xp = jnp.transpose(x, (0, 2, 1))                 # (N, L, C)
    xr = xp.reshape(-1, c)                           # (M, C)
    rm, rv = running_mean, running_var
    if training:
        var = jnp.var(xr, axis=0, ddof=1)            # unbiased, like torch.var
        mean = jnp.mean(xr, axis=0)
        rv = (1 - momentum) * rv + momentum * var
        rm = (1 - momentum) * rm + momentum * mean
    std = jnp.sqrt(rv) + eps
    out = (xp - rm) / std
    out = out * weight + bias
    return jnp.transpose(out, (0, 2, 1)), rm, rv


if __name__ == "__main__":
    key = jax.random.PRNGKey(0)
    momentum, eps = 0.01, 1e-06

    # Case 1: small shape consistent with the module: (batch=2, channels=4, seq=16)
    # Case 2: larger batch so the stats/normalize grids have more than one step.
    cases = [(2, 4, 16), (128, 4, 16)]

    ok = True
    for (N, C, L) in cases:
        key, sub = jax.random.split(key)
        x = jax.random.normal(sub, (N, C, L), dtype=jnp.float32)

        # Deterministic parameter init matching reset_parameters():
        weight = jnp.ones((C,), dtype=jnp.float32)
        bias = jnp.zeros((C,), dtype=jnp.float32)
        running_mean = jnp.zeros((C,), dtype=jnp.float32)
        running_var = jnp.ones((C,), dtype=jnp.float32)

        for training in (True, False):
            y, new_rm, new_rv = batch_renorm(
                x, weight, bias, running_mean, running_var,
                momentum=momentum, eps=eps, training=training)
            jax.block_until_ready((y, new_rm, new_rv))

            y_ref, rm_ref, rv_ref = _reference(
                x, weight, bias, running_mean, running_var,
                momentum=momentum, eps=eps, training=training)

            ok &= bool(jnp.allclose(y, y_ref, atol=1e-5, rtol=1e-5))
            ok &= bool(jnp.allclose(new_rm, rm_ref, atol=1e-5, rtol=1e-5))
            ok &= bool(jnp.allclose(new_rv, rv_ref, atol=1e-5, rtol=1e-5))

    assert ok, "Pallas batchRenorm does not match the reference"
    print("KERNEL_OK")
</pallas_src>

<mosaic_0001>
module attributes {stable_mosaic.version = 11 : i64} {
  func.func @_stats_kernel(%arg0: i32, %arg1: i32, %arg2: memref<2x4x16xf32, #tpu.memory_space<vmem>>, %arg3: memref<1x4x1xf32, #tpu.memory_space<vmem>>, %arg4: memref<1x4x1xf32, #tpu.memory_space<vmem>>) attributes {dimension_semantics = [#tpu.dimension_semantics<arbitrary>, #tpu.dimension_semantics<arbitrary>], iteration_bounds = array<i64: 1, 1>, scalar_prefetch = 0 : i64, scratch_operands = 0 : i64, tpu.core_type = #tpu.core_type<tc>, window_params = [{transform_indices = @transform_0, window_bounds = array<i64: 2, 4, 16>}, {pipeline_mode = #tpu.pipeline_mode<synchronous>, transform_indices = @transform_1, window_bounds = array<i64: 1, 4, 1>}, {pipeline_mode = #tpu.pipeline_mode<synchronous>, transform_indices = @transform_2, window_bounds = array<i64: 1, 4, 1>}]} {
    %c0_i32 = arith.constant 0 : i32
    %0 = arith.cmpi eq, %arg0, %c0_i32 : i32
    %c0_i32_0 = arith.constant 0 : i32
    %1 = arith.cmpi eq, %arg1, %c0_i32_0 : i32
    %2 = arith.andi %0, %1 : i1
    %3 = arith.extui %2 : i1 to i32
    %c0_i32_1 = arith.constant 0 : i32
    %4 = arith.cmpi ne, %3, %c0_i32_1 : i32
    scf.if %4 {
      %cst_19 = arith.constant 0.000000e+00 : f32
      %21 = vector.broadcast %cst_19 : f32 to vector<1x4x1xf32>
      %c0_20 = arith.constant 0 : index
      %c0_21 = arith.constant 0 : index
      %c0_22 = arith.constant 0 : index
      %22 = vector.load %arg3[%c0_20, %c0_21, %c0_22] : memref<1x4x1xf32, #tpu.memory_space<vmem>>, vector<1x4x1xf32>
      tpu.vector_store %arg3[%c0_20, %c0_21, %c0_22], %21 {strides = array<i32>} : memref<1x4x1xf32, #tpu.memory_space<vmem>>, vector<1x4x1xf32>,
      %cst_23 = arith.constant 0.000000e+00 : f32
      %23 = vector.broadcast %cst_23 : f32 to vector<1x4x1xf32>
      %c0_24 = arith.constant 0 : index
      %c0_25 = arith.constant 0 : index
      %c0_26 = arith.constant 0 : index
      %24 = vector.load %arg4[%c0_24, %c0_25, %c0_26] : memref<1x4x1xf32, #tpu.memory_space<vmem>>, vector<1x4x1xf32>
      tpu.vector_store %arg4[%c0_24, %c0_25, %c0_26], %23 {strides = array<i32>} : memref<1x4x1xf32, #tpu.memory_space<vmem>>, vector<1x4x1xf32>,
    } else {
    }
    %c0 = arith.constant 0 : index
    %c0_2 = arith.constant 0 : index
    %c0_3 = arith.constant 0 : index
    %5 = vector.load %arg2[%c0, %c0_2, %c0_3] : memref<2x4x16xf32, #tpu.memory_space<vmem>>, vector<2x4x16xf32>
    %cst = arith.constant dense<0.000000e+00> : vector<4x16xf32>
    %6 = vector.multi_reduction <add>, %5, %cst [0] : vector<2x4x16xf32> to vector<4x16xf32>
    %7 = vector.shape_cast %6 : vector<4x16xf32> to vector<1x4x16xf32>
    %8 = arith.mulf %5, %5 : vector<2x4x16xf32>
    %cst_4 = arith.constant dense<0.000000e+00> : vector<4x16xf32>
    %9 = vector.multi_reduction <add>, %8, %cst_4 [0] : vector<2x4x16xf32> to vector<4x16xf32>
    %10 = vector.shape_cast %9 : vector<4x16xf32> to vector<1x4x16xf32>
    %c0_5 = arith.constant 0 : index
    %c0_6 = arith.constant 0 : index
    %c0_7 = arith.constant 0 : index
    %11 = vector.load %arg3[%c0_5, %c0_6, %c0_7] : memref<1x4x1xf32, #tpu.memory_space<vmem>>, vector<1x4x1xf32>
    %cst_8 = arith.constant dense<0.000000e+00> : vector<1x4xf32>
    %12 = vector.multi_reduction <add>, %7, %cst_8 [2] : vector<1x4x16xf32> to vector<1x4xf32>
    %13 = vector.shape_cast %12 : vector<1x4xf32> to vector<1x4x1xf32>
    %14 = arith.addf %11, %13 : vector<1x4x1xf32>
    %c0_9 = arith.constant 0 : index
    %c0_10 = arith.constant 0 : index
    %c0_11 = arith.constant 0 : index
    %15 = vector.load %arg3[%c0_9, %c0_10, %c0_11] : memref<1x4x1xf32, #tpu.memory_space<vmem>>, vector<1x4x1xf32>
    tpu.vector_store %arg3[%c0_9, %c0_10, %c0_11], %14 {strides = array<i32>} : memref<1x4x1xf32, #tpu.memory_space<vmem>>, vector<1x4x1xf32>,
    %c0_12 = arith.constant 0 : index
    %c0_13 = arith.constant 0 : index
    %c0_14 = arith.constant 0 : index
    %16 = vector.load %arg4[%c0_12, %c0_13, %c0_14] : memref<1x4x1xf32, #tpu.memory_space<vmem>>, vector<1x4x1xf32>
    %cst_15 = arith.constant dense<0.000000e+00> : vector<1x4xf32>
    %17 = vector.multi_reduction <add>, %10, %cst_15 [2] : vector<1x4x16xf32> to vector<1x4xf32>
    %18 = vector.shape_cast %17 : vector<1x4xf32> to vector<1x4x1xf32>
    %19 = arith.addf %16, %18 : vector<1x4x1xf32>
    %c0_16 = arith.constant 0 : index
    %c0_17 = arith.constant 0 : index
    %c0_18 = arith.constant 0 : index
    %20 = vector.load %arg4[%c0_16, %c0_17, %c0_18] : memref<1x4x1xf32, #tpu.memory_space<vmem>>, vector<1x4x1xf32>
    tpu.vector_store %arg4[%c0_16, %c0_17, %c0_18], %19 {strides = array<i32>} : memref<1x4x1xf32, #tpu.memory_space<vmem>>, vector<1x4x1xf32>,
    return
  }
  func.func @transform_0(%arg0: i32, %arg1: i32) -> (i32, i32, i32) {
    %c0_i32 = arith.constant 0 : i32
    %c0_i32_0 = arith.constant 0 : i32
    return %arg0, %c0_i32, %arg1 : i32, i32, i32
  }
  func.func @transform_1(%arg0: i32, %arg1: i32) -> (i32, i32, i32) {
    %c0_i32 = arith.constant 0 : i32
    %c0_i32_0 = arith.constant 0 : i32
    %c0_i32_1 = arith.constant 0 : i32
    %c0_i32_2 = arith.constant 0 : i32
    return %c0_i32, %c0_i32_0, %c0_i32_1 : i32, i32, i32
  }
  func.func @transform_2(%arg0: i32, %arg1: i32) -> (i32, i32, i32) {
    %c0_i32 = arith.constant 0 : i32
    %c0_i32_0 = arith.constant 0 : i32
    %c0_i32_1 = arith.constant 0 : i32
    %c0_i32_2 = arith.constant 0 : i32
    return %c0_i32, %c0_i32_0, %c0_i32_1 : i32, i32, i32
  }
}

</mosaic_0001>

<llo_original>
// kernel: tpu_custom_call.1
$region0: #{tpu_custom_call.1}
  #allocation0 [shape = 'u32[]', space=smem, size = 0x4, offset = 0x4, fixed_abs, tag = 'smem constant byte address 0x4 - core index']
  #allocation1 [shape = 'u32[144,128]{1,0:T(1,128)}', space=vmem, size = 0x12000, scoped, tag = 'internal scratch']
  %s0 = inlined_call_operand.hbm [shape: f32[2,4,16], index: 0, kind: input, shape index: {}]
  %s1 = inlined_call_operand.vmem [shape: f32[1,4,1], index: 1, kind: output, shape index: {0}]
  %s2 = inlined_call_operand.vmem [shape: f32[1,4,1], index: 2, kind: output, shape index: {1}]
  %3 = xla_tuple %s1, %s2
  %s4 = sld [smem:[#allocation0]]
  $region30: #{tpu_custom_call.1} parent=0
    _
  %s6 = ssub.s32 1, %s4
  %s7 = scalar_select 0, %s6, %s4
  $region1: #{tpu_custom_call.1} parent=0
    #allocation2 [shape = 'u8[4096]{0}', space=vmem, size = 0x1000, scoped, tag = 'input window, operand 0, single buffered']
    #allocation3 [shape = 's32[1]{0}', space=sflag, size = 0x4, scoped, tag = 'scoped memory for tpu_custom_call.1']
    %8 = vsyncpa [#allocation3], 0
    // Predicated region
    $region2: #{tpu_custom_call.1} parent=1 // pred_check
      _
    $region3: #{tpu_custom_call.1} parent=1 // pred_check_branch
      %10 = sbr.rel (0) target = $region5
    $region4: #{tpu_custom_call.1} parent=1 // pred_region
      %s12 = ssub.s32 128, 128
      %13 = vsyncadd [#allocation3], %s12
      %s14 = sshll.u32 [#allocation2], 4
      %s15 = int_to_ptr.vmem [resolvable:$true] %s14
      %20 = dma.hbm_to_vmem [thread:$0]  %s0, 128, %s15, [#allocation3], 64, 64, 4
    $region5: #{tpu_custom_call.1} parent=1 // pred_fallthru
      _
    // Predicated region
    $region6: #{tpu_custom_call.1} parent=1 // pred_check
      _
    $region7: #{tpu_custom_call.1} parent=1 // pred_check_branch
      %22 = sbr.rel (0) target = $region9
    $region8: #{tpu_custom_call.1} parent=1 // pred_region
      %23 = dma.done [#allocation3], 128
    $region9: #{tpu_custom_call.1} parent=1 // pred_fallthru
      _
    %p24 = scmp.eq.s32.totalorder 0, 0
    %p25 = scmp.eq.s32.totalorder 0, 0
    %p26 = pnand %p24, %p25
    %p27 = pneg %p26
    // Predicated region
    $region10: #{tpu_custom_call.1} parent=1 // pred_check
      _
    $region11: #{tpu_custom_call.1} parent=1 // pred_check_branch
      %29 = sbr.rel (%p26) target = $region13
    $region12: #{tpu_custom_call.1} parent=1 // pred_region
      %vm30 = vcmask 3072
      %31 = vst.msk [vmem:[%s1] sm:$0xf] %vm30, 0.0
      %32 = vst.msk [vmem:[%s2] sm:$0xf] %vm30, 0.0
    $region13: #{tpu_custom_call.1} parent=1 // pred_fallthru
      _
    %v33 = vld [vmem:[#allocation2] sm:$0xf]
    %v34 = vld [vmem:[#allocation2 + $0x4] sm:$0xf]
    %vm35 = vcmask 125952
    %v36 = vsel %vm35, %v33, 0.0
    %v37 = vsel %vm35, %v34, 0.0
    %v38 = vadd.f32 %v36, %v37
    %v39 = vmul.f32 %v33, %v33
    %v40 = vmul.f32 %v34, %v34
    %v41 = vsel %vm35, %v39, 0.0
    %v42 = vsel %vm35, %v40, 0.0
    %v43 = vadd.f32 %v41, %v42
    %v44 = vld [vmem:[%s1] sm:$0xf]
    %v45 = vsel %vm35, %v38, 0.0
    %46 = vadd.xlane.f32.xlu0 %v45
    %v47 = vpop.xlane.xlu0 %46
    %v48 = vadd.f32 %v44, %v47
    %vm49 = vcmask 3072
    %50 = vst.msk [vmem:[%s1] sm:$0xf] %vm49, %v48
    %v51 = vld [vmem:[%s2] sm:$0xf]
    %v52 = vsel %vm35, %v43, 0.0
    %53 = vadd.xlane.f32.xlu0 %v52
    %v54 = vpop.xlane.xlu0 %53
    %v55 = vadd.f32 %v51, %v54
    %56 = vst.msk [vmem:[%s2] sm:$0xf] %vm49, %v55
    // Predicated region
    $region14: #{tpu_custom_call.1} parent=1 // pred_check
      _
    $region15: #{tpu_custom_call.1} parent=1 // pred_check_branch
      %58 = sbr.rel (0) target = $region17
    $region16: #{tpu_custom_call.1} parent=1 // pred_region
      _
    $region17: #{tpu_custom_call.1} parent=1 // pred_fallthru
      _
    // Predicated region
    $region18: #{tpu_custom_call.1} parent=1 // pred_check
      _
    $region19: #{tpu_custom_call.1} parent=1 // pred_check_branch
      %60 = sbr.rel (0) target = $region21
    $region20: #{tpu_custom_call.1} parent=1 // pred_region
      _
    $region21: #{tpu_custom_call.1} parent=1 // pred_fallthru
      _
    // Predicated region
    $region22: #{tpu_custom_call.1} parent=1 // pred_check
      _
    $region23: #{tpu_custom_call.1} parent=1 // pred_check_branch
      %62 = sbr.rel (0) target = $region25
    $region24: #{tpu_custom_call.1} parent=1 // pred_region
      _
    $region25: #{tpu_custom_call.1} parent=1 // pred_fallthru
      _
    // Predicated region
    $region26: #{tpu_custom_call.1} parent=1 // pred_check
      _
    $region27: #{tpu_custom_call.1} parent=1 // pred_check_branch
      %64 = sbr.rel (0) target = $region29
    $region28: #{tpu_custom_call.1} parent=1 // pred_region
      _
    $region29: #{tpu_custom_call.1} parent=1 // pred_fallthru
      _
    %65 = vsyncpa [#allocation3], 1

</llo_original>
